<compile_context>
chip_gen: v6e
topology: v6e:2x2x1
jax: 0.10.0
libtpu: 0.0.40
codegen_flags: <defaults>
</compile_context>

<pallas_src>
import functools

import jax
import jax.numpy as jnp
import numpy as np
from jax.experimental import pallas as pl
from jax.experimental.pallas import tpu as pltpu


def _envelope_kernel(x_ref, w_ref, pi_ref, o_ref, *, n_atoms, n_dim, out_dim):
    """Lane-dense hot path: j-contraction, sum-of-squares over i, sqrt, exp, pi-weighted atom sum.

    x_ref:  [D*A, TN]  x[j*D + i, n]       = ae_t[n, i, j]
    w_ref:  [A*O, D*D] w[k*O + l, i*D + j] = sigma[i, j, k, l]
    pi_ref: [A*O, 1]   pi[k*O + l]          = pi[k, l]
    o_ref:  [O, TN]
    """
    x = x_ref[...].astype(jnp.float32)
    w = w_ref[...].astype(jnp.float32)
    pi = pi_ref[...].astype(jnp.float32)
    tn = x.shape[1]

    out = jnp.zeros((out_dim, tn), jnp.float32)
    for k in range(n_atoms):                                   # small, unrolled at trace time
        wk = w[k * out_dim:(k + 1) * out_dim, :]               # [O, D*D]
        sq = jnp.zeros((out_dim, tn), jnp.float32)
        for i in range(n_dim):
            acc = jnp.zeros((out_dim, tn), jnp.float32)
            for j in range(n_dim):
                w_col = wk[:, i * n_dim + j: i * n_dim + j + 1]   # [O, 1]   sigma[i,j,k,:]
                x_row = x[j * n_dim + i: j * n_dim + i + 1, :]    # [1, TN]  ae_t[:, i, j]
                acc = acc + w_col * x_row                         # outer-product broadcast FMA (VPU)
            sq = sq + acc * acc
        e = jnp.exp(-jnp.sqrt(sq))                                # [O, TN]  (EUP)
        out = out + pi[k * out_dim:(k + 1) * out_dim, :] * e      # lane-broadcast of [O,1]

    o_ref[...] = out.astype(o_ref.dtype)


def full_envelope_pallas(ae, r_ae, r_ee, sigma, pi, *, tile_n=512):
    """Pallas implementation of FullEnvelope.forward.

    ae:    [B, E, A, D] atom-electron vectors
    r_ae:  [B, E, A, 1] (unused by the full envelope forward, accepted for API parity)
    r_ee:  [B, E, E, 1] (unused, API parity)
    sigma: [D, D, A, O] parameter
    pi:    [A, O] parameter
    returns [B, E, O]
    """
    del r_ae, r_ee  # not used by the reference forward pass
    B, E, A, D = ae.shape
    O = sigma.shape[-1]
    assert sigma.shape == (D, D, A, O)
    assert pi.shape == (A, O)
    assert A == D, "The reference einsum contracts atoms against spatial dims; requires n_atoms == n_dim."
    assert tile_n % 128 == 0 and tile_n >= 128

    N = B * E
    # Lane tile: multiple of 128, no bigger than needed for small N.
    tn = min(tile_n, ((N + 127) // 128) * 128)
    n_pad = ((N + tn - 1) // tn) * tn

    # --- wrapper-side layout plumbing (lane-dense: electrons on the last axis) ---
    x = jnp.transpose(ae.reshape(N, A * D))                       # [A*D, N], x[j*D+i, n] = ae[b,e,j,i]
    if n_pad != N:
        x = jnp.pad(x, ((0, 0), (0, n_pad - N)))                  # zero-pad; padded cols sliced off below
    w = jnp.transpose(sigma, (2, 3, 0, 1)).reshape(A * O, D * D)  # w[k*O+l, i*D+j] = sigma[i,j,k,l]
    pi_col = pi.reshape(A * O, 1)                                 # pi_col[k*O+l] = pi[k,l]

    kernel = functools.partial(_envelope_kernel, n_atoms=A, n_dim=D, out_dim=O)

    out = pl.pallas_call(
        kernel,
        out_shape=jax.ShapeDtypeStruct((O, n_pad), ae.dtype),
        grid_spec=pltpu.PrefetchScalarGridSpec(
            num_scalar_prefetch=0,
            grid=(n_pad // tn,),
            in_specs=[
                pl.BlockSpec((A * D, tn), lambda n: (0, n)),      # electrons tiled on lanes
                pl.BlockSpec((A * O, D * D), lambda n: (0, 0)),   # constant block: DMA once, stays in VMEM
                pl.BlockSpec((A * O, 1), lambda n: (0, 0)),       # constant block
            ],
            out_specs=pl.BlockSpec((O, tn), lambda n: (0, n)),    # lane-dense output slab
        ),
        compiler_params=pltpu.CompilerParams(dimension_semantics=("parallel",)),
    )(x, w, pi_col)

    return jnp.transpose(out[:, :N]).reshape(B, E, O)


def full_envelope_reference(ae, sigma, pi):
    """Pure-JAX mirror of the PyTorch forward for correctness checking."""
    ae_t = jnp.transpose(ae, (0, 1, 3, 2))                                    # [B,E,D,A]
    ae_sigma = jnp.einsum('ijkl,mnij->mnikl', sigma, ae_t,
                          precision=jax.lax.Precision.HIGHEST)                # [B,E,D,A,O]
    r_ae_sigma = jnp.sqrt(jnp.sum(ae_sigma * ae_sigma, axis=2))               # [B,E,A,O]
    return jnp.sum(jnp.exp(-r_ae_sigma) * pi, axis=2)                         # [B,E,O]


if __name__ == "__main__":
    # Small shapes consistent with the module: the reference einsum requires n_atoms == n_dim == 3.
    B, E, A, D, O = 2, 8, 3, 3, 8

    key = jax.random.PRNGKey(0)
    k_ae, k_ree, k_pi, k_sig, k_ae2 = jax.random.split(key, 5)

    ae = jax.random.normal(k_ae, (B, E, A, D), dtype=jnp.float32)
    r_ae = jnp.linalg.norm(ae, axis=-1, keepdims=True)                 # [B,E,A,1] (unused)
    r_ee = jax.random.uniform(k_ree, (B, E, E, 1), dtype=jnp.float32)  # (unused)

    # Parameters: module-style init (ones / expanded identity) plus a small deterministic
    # perturbation so the anisotropic terms are exercised.
    pi = jnp.ones((A, O), jnp.float32) + 0.1 * jax.random.normal(k_pi, (A, O), dtype=jnp.float32)
    sigma_eye = jnp.broadcast_to(jnp.eye(D, dtype=jnp.float32)[:, :, None, None], (D, D, A, O))
    sigma = sigma_eye + 0.1 * jax.random.normal(k_sig, (D, D, A, O), dtype=jnp.float32)

    out = jax.block_until_ready(full_envelope_pallas(ae, r_ae, r_ee, sigma, pi))
    ref = full_envelope_reference(ae, sigma, pi)
    np.testing.assert_allclose(np.asarray(out), np.asarray(ref), rtol=1e-5, atol=1e-5)

    # Second check: exercises zero-padding of N and a multi-step (grid > 1) parallel grid.
    B2, E2 = 3, 200                                                    # N = 600 -> two 512-lane tiles
    ae2 = jax.random.normal(k_ae2, (B2, E2, A, D), dtype=jnp.float32)
    r_ae2 = jnp.linalg.norm(ae2, axis=-1, keepdims=True)
    r_ee2 = jnp.zeros((B2, E2, E2, 1), jnp.float32)
    out2 = jax.block_until_ready(full_envelope_pallas(ae2, r_ae2, r_ee2, sigma, pi))
    ref2 = full_envelope_reference(ae2, sigma, pi)
    np.testing.assert_allclose(np.asarray(out2), np.asarray(ref2), rtol=1e-5, atol=1e-5)

    print("KERNEL_OK")
</pallas_src>

<mosaic_0001>
module attributes {stable_mosaic.version = 11 : i64} {
  func.func @_envelope_kernel(%arg0: i32, %arg1: memref<9x128xf32, #tpu.memory_space<vmem>>, %arg2: memref<24x9xf32, #tpu.memory_space<vmem>>, %arg3: memref<24x1xf32, #tpu.memory_space<vmem>>, %arg4: memref<8x128xf32, #tpu.memory_space<vmem>>) attributes {dimension_semantics = [#tpu.dimension_semantics<parallel>], iteration_bounds = array<i64: 1>, scalar_prefetch = 0 : i64, scratch_operands = 0 : i64, tpu.core_type = #tpu.core_type<tc>, window_params = [{transform_indices = @transform_0, window_bounds = array<i64: 9, 128>}, {pipeline_mode = #tpu.pipeline_mode<synchronous>, transform_indices = @transform_1, window_bounds = array<i64: 24, 9>}, {pipeline_mode = #tpu.pipeline_mode<synchronous>, transform_indices = @transform_2, window_bounds = array<i64: 24, 1>}, {transform_indices = @transform_3, window_bounds = array<i64: 8, 128>}]} {
    %c0 = arith.constant 0 : index
    %c0_0 = arith.constant 0 : index
    %0 = vector.load %arg1[%c0, %c0_0] : memref<9x128xf32, #tpu.memory_space<vmem>>, vector<9x128xf32>
    %c0_1 = arith.constant 0 : index
    %c0_2 = arith.constant 0 : index
    %1 = vector.load %arg2[%c0_1, %c0_2] : memref<24x9xf32, #tpu.memory_space<vmem>>, vector<24x9xf32>
    %c0_3 = arith.constant 0 : index
    %c0_4 = arith.constant 0 : index
    %2 = vector.load %arg3[%c0_3, %c0_4] : memref<24x1xf32, #tpu.memory_space<vmem>>, vector<24x1xf32>
    %cst = arith.constant 0.000000e+00 : f32
    %3 = vector.broadcast %cst : f32 to vector<8x128xf32>
    %4 = vector.extract_strided_slice %1 {offsets = [0, 0], sizes = [8, 9], strides = [1, 1]} : vector<24x9xf32> to vector<8x9xf32>
    %cst_5 = arith.constant 0.000000e+00 : f32
    %5 = vector.broadcast %cst_5 : f32 to vector<8x128xf32>
    %cst_6 = arith.constant 0.000000e+00 : f32
    %6 = vector.broadcast %cst_6 : f32 to vector<8x128xf32>
    %7 = vector.extract_strided_slice %4 {offsets = [0, 0], sizes = [8, 1], strides = [1, 1]} : vector<8x9xf32> to vector<8x1xf32>
    %8 = vector.extract_strided_slice %0 {offsets = [0, 0], sizes = [1, 128], strides = [1, 1]} : vector<9x128xf32> to vector<1x128xf32>
    %9 = vector.broadcast %7 : vector<8x1xf32> to vector<8x128xf32>
    %10 = vector.broadcast %8 : vector<1x128xf32> to vector<8x128xf32>
    %11 = arith.mulf %9, %10 : vector<8x128xf32>
    %12 = arith.addf %6, %11 : vector<8x128xf32>
    %13 = vector.extract_strided_slice %4 {offsets = [0, 1], sizes = [8, 1], strides = [1, 1]} : vector<8x9xf32> to vector<8x1xf32>
    %14 = vector.extract_strided_slice %0 {offsets = [3, 0], sizes = [1, 128], strides = [1, 1]} : vector<9x128xf32> to vector<1x128xf32>
    %15 = vector.broadcast %13 : vector<8x1xf32> to vector<8x128xf32>
    %16 = vector.broadcast %14 : vector<1x128xf32> to vector<8x128xf32>
    %17 = arith.mulf %15, %16 : vector<8x128xf32>
    %18 = arith.addf %12, %17 : vector<8x128xf32>
    %19 = vector.extract_strided_slice %4 {offsets = [0, 2], sizes = [8, 1], strides = [1, 1]} : vector<8x9xf32> to vector<8x1xf32>
    %20 = vector.extract_strided_slice %0 {offsets = [6, 0], sizes = [1, 128], strides = [1, 1]} : vector<9x128xf32> to vector<1x128xf32>
    %21 = vector.broadcast %19 : vector<8x1xf32> to vector<8x128xf32>
    %22 = vector.broadcast %20 : vector<1x128xf32> to vector<8x128xf32>
    %23 = arith.mulf %21, %22 : vector<8x128xf32>
    %24 = arith.addf %18, %23 : vector<8x128xf32>
    %25 = arith.mulf %24, %24 : vector<8x128xf32>
    %26 = arith.addf %5, %25 : vector<8x128xf32>
    %cst_7 = arith.constant 0.000000e+00 : f32
    %27 = vector.broadcast %cst_7 : f32 to vector<8x128xf32>
    %28 = vector.extract_strided_slice %4 {offsets = [0, 3], sizes = [8, 1], strides = [1, 1]} : vector<8x9xf32> to vector<8x1xf32>
    %29 = vector.extract_strided_slice %0 {offsets = [1, 0], sizes = [1, 128], strides = [1, 1]} : vector<9x128xf32> to vector<1x128xf32>
    %30 = vector.broadcast %28 : vector<8x1xf32> to vector<8x128xf32>
    %31 = vector.broadcast %29 : vector<1x128xf32> to vector<8x128xf32>
    %32 = arith.mulf %30, %31 : vector<8x128xf32>
    %33 = arith.addf %27, %32 : vector<8x128xf32>
    %34 = vector.extract_strided_slice %4 {offsets = [0, 4], sizes = [8, 1], strides = [1, 1]} : vector<8x9xf32> to vector<8x1xf32>
    %35 = vector.extract_strided_slice %0 {offsets = [4, 0], sizes = [1, 128], strides = [1, 1]} : vector<9x128xf32> to vector<1x128xf32>
    %36 = vector.broadcast %34 : vector<8x1xf32> to vector<8x128xf32>
    %37 = vector.broadcast %35 : vector<1x128xf32> to vector<8x128xf32>
    %38 = arith.mulf %36, %37 : vector<8x128xf32>
    %39 = arith.addf %33, %38 : vector<8x128xf32>
    %40 = vector.extract_strided_slice %4 {offsets = [0, 5], sizes = [8, 1], strides = [1, 1]} : vector<8x9xf32> to vector<8x1xf32>
    %41 = vector.extract_strided_slice %0 {offsets = [7, 0], sizes = [1, 128], strides = [1, 1]} : vector<9x128xf32> to vector<1x128xf32>
    %42 = vector.broadcast %40 : vector<8x1xf32> to vector<8x128xf32>
    %43 = vector.broadcast %41 : vector<1x128xf32> to vector<8x128xf32>
    %44 = arith.mulf %42, %43 : vector<8x128xf32>
    %45 = arith.addf %39, %44 : vector<8x128xf32>
    %46 = arith.mulf %45, %45 : vector<8x128xf32>
    %47 = arith.addf %26, %46 : vector<8x128xf32>
    %cst_8 = arith.constant 0.000000e+00 : f32
    %48 = vector.broadcast %cst_8 : f32 to vector<8x128xf32>
    %49 = vector.extract_strided_slice %4 {offsets = [0, 6], sizes = [8, 1], strides = [1, 1]} : vector<8x9xf32> to vector<8x1xf32>
    %50 = vector.extract_strided_slice %0 {offsets = [2, 0], sizes = [1, 128], strides = [1, 1]} : vector<9x128xf32> to vector<1x128xf32>
    %51 = vector.broadcast %49 : vector<8x1xf32> to vector<8x128xf32>
    %52 = vector.broadcast %50 : vector<1x128xf32> to vector<8x128xf32>
    %53 = arith.mulf %51, %52 : vector<8x128xf32>
    %54 = arith.addf %48, %53 : vector<8x128xf32>
    %55 = vector.extract_strided_slice %4 {offsets = [0, 7], sizes = [8, 1], strides = [1, 1]} : vector<8x9xf32> to vector<8x1xf32>
    %56 = vector.extract_strided_slice %0 {offsets = [5, 0], sizes = [1, 128], strides = [1, 1]} : vector<9x128xf32> to vector<1x128xf32>
    %57 = vector.broadcast %55 : vector<8x1xf32> to vector<8x128xf32>
    %58 = vector.broadcast %56 : vector<1x128xf32> to vector<8x128xf32>
    %59 = arith.mulf %57, %58 : vector<8x128xf32>
    %60 = arith.addf %54, %59 : vector<8x128xf32>
    %61 = vector.extract_strided_slice %4 {offsets = [0, 8], sizes = [8, 1], strides = [1, 1]} : vector<8x9xf32> to vector<8x1xf32>
    %62 = vector.extract_strided_slice %0 {offsets = [8, 0], sizes = [1, 128], strides = [1, 1]} : vector<9x128xf32> to vector<1x128xf32>
    %63 = vector.broadcast %61 : vector<8x1xf32> to vector<8x128xf32>
    %64 = vector.broadcast %62 : vector<1x128xf32> to vector<8x128xf32>
    %65 = arith.mulf %63, %64 : vector<8x128xf32>
    %66 = arith.addf %60, %65 : vector<8x128xf32>
    %67 = arith.mulf %66, %66 : vector<8x128xf32>
    %68 = arith.addf %47, %67 : vector<8x128xf32>
    %69 = math.sqrt %68 : vector<8x128xf32>
    %cst_9 = arith.constant 0.000000e+00 : f32
    %70 = vector.broadcast %cst_9 : f32 to vector<8x128xf32>
    %71 = arith.subf %70, %69 : vector<8x128xf32>
    %72 = math.exp %71 : vector<8x128xf32>
    %73 = vector.extract_strided_slice %2 {offsets = [0, 0], sizes = [8, 1], strides = [1, 1]} : vector<24x1xf32> to vector<8x1xf32>
    %74 = vector.broadcast %73 : vector<8x1xf32> to vector<8x128xf32>
    %75 = arith.mulf %74, %72 : vector<8x128xf32>
    %76 = arith.addf %3, %75 : vector<8x128xf32>
    %77 = vector.extract_strided_slice %1 {offsets = [8, 0], sizes = [8, 9], strides = [1, 1]} : vector<24x9xf32> to vector<8x9xf32>
    %cst_10 = arith.constant 0.000000e+00 : f32
    %78 = vector.broadcast %cst_10 : f32 to vector<8x128xf32>
    %cst_11 = arith.constant 0.000000e+00 : f32
    %79 = vector.broadcast %cst_11 : f32 to vector<8x128xf32>
    %80 = vector.extract_strided_slice %77 {offsets = [0, 0], sizes = [8, 1], strides = [1, 1]} : vector<8x9xf32> to vector<8x1xf32>
    %81 = vector.extract_strided_slice %0 {offsets = [0, 0], sizes = [1, 128], strides = [1, 1]} : vector<9x128xf32> to vector<1x128xf32>
    %82 = vector.broadcast %80 : vector<8x1xf32> to vector<8x128xf32>
    %83 = vector.broadcast %81 : vector<1x128xf32> to vector<8x128xf32>
    %84 = arith.mulf %82, %83 : vector<8x128xf32>
    %85 = arith.addf %79, %84 : vector<8x128xf32>
    %86 = vector.extract_strided_slice %77 {offsets = [0, 1], sizes = [8, 1], strides = [1, 1]} : vector<8x9xf32> to vector<8x1xf32>
    %87 = vector.extract_strided_slice %0 {offsets = [3, 0], sizes = [1, 128], strides = [1, 1]} : vector<9x128xf32> to vector<1x128xf32>
    %88 = vector.broadcast %86 : vector<8x1xf32> to vector<8x128xf32>
    %89 = vector.broadcast %87 : vector<1x128xf32> to vector<8x128xf32>
    %90 = arith.mulf %88, %89 : vector<8x128xf32>
    %91 = arith.addf %85, %90 : vector<8x128xf32>
    %92 = vector.extract_strided_slice %77 {offsets = [0, 2], sizes = [8, 1], strides = [1, 1]} : vector<8x9xf32> to vector<8x1xf32>
    %93 = vector.extract_strided_slice %0 {offsets = [6, 0], sizes = [1, 128], strides = [1, 1]} : vector<9x128xf32> to vector<1x128xf32>
    %94 = vector.broadcast %92 : vector<8x1xf32> to vector<8x128xf32>
    %95 = vector.broadcast %93 : vector<1x128xf32> to vector<8x128xf32>
    %96 = arith.mulf %94, %95 : vector<8x128xf32>
    %97 = arith.addf %91, %96 : vector<8x128xf32>
    %98 = arith.mulf %97, %97 : vector<8x128xf32>
    %99 = arith.addf %78, %98 : vector<8x128xf32>
    %cst_12 = arith.constant 0.000000e+00 : f32
    %100 = vector.broadcast %cst_12 : f32 to vector<8x128xf32>
    %101 = vector.extract_strided_slice %77 {offsets = [0, 3], sizes = [8, 1], strides = [1, 1]} : vector<8x9xf32> to vector<8x1xf32>
    %102 = vector.extract_strided_slice %0 {offsets = [1, 0], sizes = [1, 128], strides = [1, 1]} : vector<9x128xf32> to vector<1x128xf32>
    %103 = vector.broadcast %101 : vector<8x1xf32> to vector<8x128xf32>
    %104 = vector.broadcast %102 : vector<1x128xf32> to vector<8x128xf32>
    %105 = arith.mulf %103, %104 : vector<8x128xf32>
    %106 = arith.addf %100, %105 : vector<8x128xf32>
    %107 = vector.extract_strided_slice %77 {offsets = [0, 4], sizes = [8, 1], strides = [1, 1]} : vector<8x9xf32> to vector<8x1xf32>
    %108 = vector.extract_strided_slice %0 {offsets = [4, 0], sizes = [1, 128], strides = [1, 1]} : vector<9x128xf32> to vector<1x128xf32>
    %109 = vector.broadcast %107 : vector<8x1xf32> to vector<8x128xf32>
    %110 = vector.broadcast %108 : vector<1x128xf32> to vector<8x128xf32>
    %111 = arith.mulf %109, %110 : vector<8x128xf32>
    %112 = arith.addf %106, %111 : vector<8x128xf32>
    %113 = vector.extract_strided_slice %77 {offsets = [0, 5], sizes = [8, 1], strides = [1, 1]} : vector<8x9xf32> to vector<8x1xf32>
    %114 = vector.extract_strided_slice %0 {offsets = [7, 0], sizes = [1, 128], strides = [1, 1]} : vector<9x128xf32> to vector<1x128xf32>
    %115 = vector.broadcast %113 : vector<8x1xf32> to vector<8x128xf32>
    %116 = vector.broadcast %114 : vector<1x128xf32> to vector<8x128xf32>
    %117 = arith.mulf %115, %116 : vector<8x128xf32>
    %118 = arith.addf %112, %117 : vector<8x128xf32>
    %119 = arith.mulf %118, %118 : vector<8x128xf32>
    %120 = arith.addf %99, %119 : vector<8x128xf32>
    %cst_13 = arith.constant 0.000000e+00 : f32
    %121 = vector.broadcast %cst_13 : f32 to vector<8x128xf32>
    %122 = vector.extract_strided_slice %77 {offsets = [0, 6], sizes = [8, 1], strides = [1, 1]} : vector<8x9xf32> to vector<8x1xf32>
    %123 = vector.extract_strided_slice %0 {offsets = [2, 0], sizes = [1, 128], strides = [1, 1]} : vector<9x128xf32> to vector<1x128xf32>
    %124 = vector.broadcast %122 : vector<8x1xf32> to vector<8x128xf32>
    %125 = vector.broadcast %123 : vector<1x128xf32> to vector<8x128xf32>
    %126 = arith.mulf %124, %125 : vector<8x128xf32>
    %127 = arith.addf %121, %126 : vector<8x128xf32>
    %128 = vector.extract_strided_slice %77 {offsets = [0, 7], sizes = [8, 1], strides = [1, 1]} : vector<8x9xf32> to vector<8x1xf32>
    %129 = vector.extract_strided_slice %0 {offsets = [5, 0], sizes = [1, 128], strides = [1, 1]} : vector<9x128xf32> to vector<1x128xf32>
    %130 = vector.broadcast %128 : vector<8x1xf32> to vector<8x128xf32>
    %131 = vector.broadcast %129 : vector<1x128xf32> to vector<8x128xf32>
    %132 = arith.mulf %130, %131 : vector<8x128xf32>
    %133 = arith.addf %127, %132 : vector<8x128xf32>
    %134 = vector.extract_strided_slice %77 {offsets = [0, 8], sizes = [8, 1], strides = [1, 1]} : vector<8x9xf32> to vector<8x1xf32>
    %135 = vector.extract_strided_slice %0 {offsets = [8, 0], sizes = [1, 128], strides = [1, 1]} : vector<9x128xf32> to vector<1x128xf32>
    %136 = vector.broadcast %134 : vector<8x1xf32> to vector<8x128xf32>
    %137 = vector.broadcast %135 : vector<1x128xf32> to vector<8x128xf32>
    %138 = arith.mulf %136, %137 : vector<8x128xf32>
    %139 = arith.addf %133, %138 : vector<8x128xf32>
    %140 = arith.mulf %139, %139 : vector<8x128xf32>
    %141 = arith.addf %120, %140 : vector<8x128xf32>
    %142 = math.sqrt %141 : vector<8x128xf32>
    %cst_14 = arith.constant 0.000000e+00 : f32
    %143 = vector.broadcast %cst_14 : f32 to vector<8x128xf32>
    %144 = arith.subf %143, %142 : vector<8x128xf32>
    %145 = math.exp %144 : vector<8x128xf32>
    %146 = vector.extract_strided_slice %2 {offsets = [8, 0], sizes = [8, 1], strides = [1, 1]} : vector<24x1xf32> to vector<8x1xf32>
    %147 = vector.broadcast %146 : vector<8x1xf32> to vector<8x128xf32>
    %148 = arith.mulf %147, %145 : vector<8x128xf32>
    %149 = arith.addf %76, %148 : vector<8x128xf32>
    %150 = vector.extract_strided_slice %1 {offsets = [16, 0], sizes = [8, 9], strides = [1, 1]} : vector<24x9xf32> to vector<8x9xf32>
    %cst_15 = arith.constant 0.000000e+00 : f32
    %151 = vector.broadcast %cst_15 : f32 to vector<8x128xf32>
    %cst_16 = arith.constant 0.000000e+00 : f32
    %152 = vector.broadcast %cst_16 : f32 to vector<8x128xf32>
    %153 = vector.extract_strided_slice %150 {offsets = [0, 0], sizes = [8, 1], strides = [1, 1]} : vector<8x9xf32> to vector<8x1xf32>
    %154 = vector.extract_strided_slice %0 {offsets = [0, 0], sizes = [1, 128], strides = [1, 1]} : vector<9x128xf32> to vector<1x128xf32>
    %155 = vector.broadcast %153 : vector<8x1xf32> to vector<8x128xf32>
    %156 = vector.broadcast %154 : vector<1x128xf32> to vector<8x128xf32>
    %157 = arith.mulf %155, %156 : vector<8x128xf32>
    %158 = arith.addf %152, %157 : vector<8x128xf32>
    %159 = vector.extract_strided_slice %150 {offsets = [0, 1], sizes = [8, 1], strides = [1, 1]} : vector<8x9xf32> to vector<8x1xf32>
    %160 = vector.extract_strided_slice %0 {offsets = [3, 0], sizes = [1, 128], strides = [1, 1]} : vector<9x128xf32> to vector<1x128xf32>
    %161 = vector.broadcast %159 : vector<8x1xf32> to vector<8x128xf32>
    %162 = vector.broadcast %160 : vector<1x128xf32> to vector<8x128xf32>
    %163 = arith.mulf %161, %162 : vector<8x128xf32>
    %164 = arith.addf %158, %163 : vector<8x128xf32>
    %165 = vector.extract_strided_slice %150 {offsets = [0, 2], sizes = [8, 1], strides = [1, 1]} : vector<8x9xf32> to vector<8x1xf32>
    %166 = vector.extract_strided_slice %0 {offsets = [6, 0], sizes = [1, 128], strides = [1, 1]} : vector<9x128xf32> to vector<1x128xf32>
    %167 = vector.broadcast %165 : vector<8x1xf32> to vector<8x128xf32>
    %168 = vector.broadcast %166 : vector<1x128xf32> to vector<8x128xf32>
    %169 = arith.mulf %167, %168 : vector<8x128xf32>
    %170 = arith.addf %164, %169 : vector<8x128xf32>
    %171 = arith.mulf %170, %170 : vector<8x128xf32>
    %172 = arith.addf %151, %171 : vector<8x128xf32>
    %cst_17 = arith.constant 0.000000e+00 : f32
    %173 = vector.broadcast %cst_17 : f32 to vector<8x128xf32>
    %174 = vector.extract_strided_slice %150 {offsets = [0, 3], sizes = [8, 1], strides = [1, 1]} : vector<8x9xf32> to vector<8x1xf32>
    %175 = vector.extract_strided_slice %0 {offsets = [1, 0], sizes = [1, 128], strides = [1, 1]} : vector<9x128xf32> to vector<1x128xf32>
    %176 = vector.broadcast %174 : vector<8x1xf32> to vector<8x128xf32>
    %177 = vector.broadcast %175 : vector<1x128xf32> to vector<8x128xf32>
    %178 = arith.mulf %176, %177 : vector<8x128xf32>
    %179 = arith.addf %173, %178 : vector<8x128xf32>
    %180 = vector.extract_strided_slice %150 {offsets = [0, 4], sizes = [8, 1], strides = [1, 1]} : vector<8x9xf32> to vector<8x1xf32>
    %181 = vector.extract_strided_slice %0 {offsets = [4, 0], sizes = [1, 128], strides = [1, 1]} : vector<9x128xf32> to vector<1x128xf32>
    %182 = vector.broadcast %180 : vector<8x1xf32> to vector<8x128xf32>
    %183 = vector.broadcast %181 : vector<1x128xf32> to vector<8x128xf32>
    %184 = arith.mulf %182, %183 : vector<8x128xf32>
    %185 = arith.addf %179, %184 : vector<8x128xf32>
    %186 = vector.extract_strided_slice %150 {offsets = [0, 5], sizes = [8, 1], strides = [1, 1]} : vector<8x9xf32> to vector<8x1xf32>
    %187 = vector.extract_strided_slice %0 {offsets = [7, 0], sizes = [1, 128], strides = [1, 1]} : vector<9x128xf32> to vector<1x128xf32>
    %188 = vector.broadcast %186 : vector<8x1xf32> to vector<8x128xf32>
    %189 = vector.broadcast %187 : vector<1x128xf32> to vector<8x128xf32>
    %190 = arith.mulf %188, %189 : vector<8x128xf32>
    %191 = arith.addf %185, %190 : vector<8x128xf32>
    %192 = arith.mulf %191, %191 : vector<8x128xf32>
    %193 = arith.addf %172, %192 : vector<8x128xf32>
    %cst_18 = arith.constant 0.000000e+00 : f32
    %194 = vector.broadcast %cst_18 : f32 to vector<8x128xf32>
    %195 = vector.extract_strided_slice %150 {offsets = [0, 6], sizes = [8, 1], strides = [1, 1]} : vector<8x9xf32> to vector<8x1xf32>
    %196 = vector.extract_strided_slice %0 {offsets = [2, 0], sizes = [1, 128], strides = [1, 1]} : vector<9x128xf32> to vector<1x128xf32>
    %197 = vector.broadcast %195 : vector<8x1xf32> to vector<8x128xf32>
    %198 = vector.broadcast %196 : vector<1x128xf32> to vector<8x128xf32>
    %199 = arith.mulf %197, %198 : vector<8x128xf32>
    %200 = arith.addf %194, %199 : vector<8x128xf32>
    %201 = vector.extract_strided_slice %150 {offsets = [0, 7], sizes = [8, 1], strides = [1, 1]} : vector<8x9xf32> to vector<8x1xf32>
    %202 = vector.extract_strided_slice %0 {offsets = [5, 0], sizes = [1, 128], strides = [1, 1]} : vector<9x128xf32> to vector<1x128xf32>
    %203 = vector.broadcast %201 : vector<8x1xf32> to vector<8x128xf32>
    %204 = vector.broadcast %202 : vector<1x128xf32> to vector<8x128xf32>
    %205 = arith.mulf %203, %204 : vector<8x128xf32>
    %206 = arith.addf %200, %205 : vector<8x128xf32>
    %207 = vector.extract_strided_slice %150 {offsets = [0, 8], sizes = [8, 1], strides = [1, 1]} : vector<8x9xf32> to vector<8x1xf32>
    %208 = vector.extract_strided_slice %0 {offsets = [8, 0], sizes = [1, 128], strides = [1, 1]} : vector<9x128xf32> to vector<1x128xf32>
    %209 = vector.broadcast %207 : vector<8x1xf32> to vector<8x128xf32>
    %210 = vector.broadcast %208 : vector<1x128xf32> to vector<8x128xf32>
    %211 = arith.mulf %209, %210 : vector<8x128xf32>
    %212 = arith.addf %206, %211 : vector<8x128xf32>
    %213 = arith.mulf %212, %212 : vector<8x128xf32>
    %214 = arith.addf %193, %213 : vector<8x128xf32>
    %215 = math.sqrt %214 : vector<8x128xf32>
    %cst_19 = arith.constant 0.000000e+00 : f32
    %216 = vector.broadcast %cst_19 : f32 to vector<8x128xf32>
    %217 = arith.subf %216, %215 : vector<8x128xf32>
    %218 = math.exp %217 : vector<8x128xf32>
    %219 = vector.extract_strided_slice %2 {offsets = [16, 0], sizes = [8, 1], strides = [1, 1]} : vector<24x1xf32> to vector<8x1xf32>
    %220 = vector.broadcast %219 : vector<8x1xf32> to vector<8x128xf32>
    %221 = arith.mulf %220, %218 : vector<8x128xf32>
    %222 = arith.addf %149, %221 : vector<8x128xf32>
    %c0_20 = arith.constant 0 : index
    %c0_21 = arith.constant 0 : index
    %223 = vector.load %arg4[%c0_20, %c0_21] : memref<8x128xf32, #tpu.memory_space<vmem>>, vector<8x128xf32>
    tpu.vector_store %arg4[%c0_20, %c0_21], %222 {strides = array<i32>} : memref<8x128xf32, #tpu.memory_space<vmem>>, vector<8x128xf32>,
    return
  }
  func.func @transform_0(%arg0: i32) -> (i32, i32) {
    %c0_i32 = arith.constant 0 : i32
    %c0_i32_0 = arith.constant 0 : i32
    return %c0_i32, %arg0 : i32, i32
  }
  func.func @transform_1(%arg0: i32) -> (i32, i32) {
    %c0_i32 = arith.constant 0 : i32
    %c0_i32_0 = arith.constant 0 : i32
    %c0_i32_1 = arith.constant 0 : i32
    return %c0_i32, %c0_i32_0 : i32, i32
  }
  func.func @transform_2(%arg0: i32) -> (i32, i32) {
    %c0_i32 = arith.constant 0 : i32
    %c0_i32_0 = arith.constant 0 : i32
    %c0_i32_1 = arith.constant 0 : i32
    return %c0_i32, %c0_i32_0 : i32, i32
  }
  func.func @transform_3(%arg0: i32) -> (i32, i32) {
    %c0_i32 = arith.constant 0 : i32
    %c0_i32_0 = arith.constant 0 : i32
    return %c0_i32, %arg0 : i32, i32
  }
}

</mosaic_0001>

<llo_original>
// kernel: tpu_custom_call.1
$region0: #{tpu_custom_call.1}
  #allocation0 [shape = 'u32[]', space=smem, size = 0x4, offset = 0x4, fixed_abs, tag = 'smem constant byte address 0x4 - core index']
  #allocation1 [shape = 'u32[144,128]{1,0:T(1,128)}', space=vmem, size = 0x12000, scoped, tag = 'internal scratch']
  %s0 = inlined_call_operand.vmem [shape: f32[9,128], index: 0, kind: input, shape index: {}]
  %s1 = inlined_call_operand.vmem [shape: f32[24,9], index: 1, kind: input, shape index: {}]
  %s2 = inlined_call_operand.vmem [shape: f32[24,1], index: 2, kind: input, shape index: {}]
  %s3 = inlined_call_operand.hbm [shape: f32[8,128], index: 3, kind: output, shape index: {}]
  %s4 = sld [smem:[#allocation0]]
  $region22: #{tpu_custom_call.1} parent=0
    _
  %s6 = ssub.s32 1, %s4
  %s7 = scalar_select 0, %s6, %s4
  $region1: #{tpu_custom_call.1} parent=0
    #allocation2 [shape = 'u8[4096]{0}', space=vmem, size = 0x1000, scoped, tag = 'output window, operand 0, single buffered']
    #allocation3 [shape = 's32[1]{0}', space=sflag, size = 0x4, scoped, tag = 'scoped memory for tpu_custom_call.1']
    %8 = vsyncpa [#allocation3], 0
    // Predicated region
    $region2: #{tpu_custom_call.1} parent=1 // pred_check
      _
    $region3: #{tpu_custom_call.1} parent=1 // pred_check_branch
      %10 = sbr.rel (0) target = $region5
    $region4: #{tpu_custom_call.1} parent=1 // pred_region
      _
    $region5: #{tpu_custom_call.1} parent=1 // pred_fallthru
      _
    // Predicated region
    $region6: #{tpu_custom_call.1} parent=1 // pred_check
      _
    $region7: #{tpu_custom_call.1} parent=1 // pred_check_branch
      %12 = sbr.rel (0) target = $region9
    $region8: #{tpu_custom_call.1} parent=1 // pred_region
      _
    $region9: #{tpu_custom_call.1} parent=1 // pred_fallthru
      _
    // Predicated region
    $region10: #{tpu_custom_call.1} parent=1 // pred_check
      _
    $region11: #{tpu_custom_call.1} parent=1 // pred_check_branch
      %14 = sbr.rel (0) target = $region13
    $region12: #{tpu_custom_call.1} parent=1 // pred_region
      _
    $region13: #{tpu_custom_call.1} parent=1 // pred_fallthru
      _
    %v15 = vld [vmem:[%s0] sm:$0xff]
    %v16 = vld [vmem:[%s0 + $0x8] sm:$0x1]
    %v17 = vld [vmem:[%s1] sm:$0xff]
    %v18 = vld [vmem:[%s1 + $0x8] sm:$0xff]
    %v19 = vld [vmem:[%s1 + $0x10] sm:$0xff]
    %v20 = vld [vmem:[%s2] sm:$0xff]
    %v21 = vld [vmem:[%s2 + $0x8] sm:$0xff]
    %v22 = vld [vmem:[%s2 + $0x10] sm:$0xff]
    %24 = vset.pattern.permute.xlu0 0
    %25 = vperm.xlu0 %24, %v17
    %v26 = vpop.permute.xlu0 %25
    %v28 = vlaneseq
    %v29 = vshrl.u32 %v28, 7
    %v30 = vsub.s32 0, %v29
    %v31 = vrot.slane %v15, %v30
    %v32 = vmul.f32 %v26, %v31
    %v33 = vadd.f32 %v32, 0.0
    %34 = vset.pattern.permute.xlu0 1
    %35 = vperm.xlu0 %34, %v17
    %v36 = vpop.permute.xlu0 %35
    %v38 = vlaneseq
    %v39 = vshrl.u32 %v38, 7
    %v40 = vsub.s32 3, %v39
    %v41 = vrot.slane %v15, %v40
    %v42 = vmul.f32 %v36, %v41
    %v43 = vadd.f32 %v33, %v42
    %44 = vset.pattern.permute.xlu0 2
    %45 = vperm.xlu0 %44, %v17
    %v46 = vpop.permute.xlu0 %45
    %v48 = vlaneseq
    %v49 = vshrl.u32 %v48, 7
    %v50 = vsub.s32 6, %v49
    %v51 = vrot.slane %v15, %v50
    %v52 = vmul.f32 %v46, %v51
    %v53 = vadd.f32 %v43, %v52
    %v54 = vmul.f32 %v53, %v53
    %v55 = vadd.f32 %v54, 0.0
    %56 = vset.pattern.permute.xlu0 3
    %57 = vperm.xlu0 %56, %v17
    %v58 = vpop.permute.xlu0 %57
    %v60 = vlaneseq
    %v61 = vshrl.u32 %v60, 7
    %v62 = vsub.s32 1, %v61
    %v63 = vrot.slane %v15, %v62
    %v64 = vmul.f32 %v58, %v63
    %v65 = vadd.f32 %v64, 0.0
    %66 = vset.pattern.permute.xlu0 4
    %67 = vperm.xlu0 %66, %v17
    %v68 = vpop.permute.xlu0 %67
    %v70 = vlaneseq
    %v71 = vshrl.u32 %v70, 7
    %v72 = vsub.s32 4, %v71
    %v73 = vrot.slane %v15, %v72
    %v74 = vmul.f32 %v68, %v73
    %v75 = vadd.f32 %v65, %v74
    %76 = vset.pattern.permute.xlu0 5
    %77 = vperm.xlu0 %76, %v17
    %v78 = vpop.permute.xlu0 %77
    %v80 = vlaneseq
    %v81 = vshrl.u32 %v80, 7
    %v82 = vsub.s32 7, %v81
    %v83 = vrot.slane %v15, %v82
    %v84 = vmul.f32 %v78, %v83
    %v85 = vadd.f32 %v75, %v84
    %v86 = vmul.f32 %v85, %v85
    %v87 = vadd.f32 %v55, %v86
    %88 = vset.pattern.permute.xlu0 6
    %89 = vperm.xlu0 %88, %v17
    %v90 = vpop.permute.xlu0 %89
    %v92 = vlaneseq
    %v93 = vshrl.u32 %v92, 7
    %v94 = vsub.s32 2, %v93
    %v95 = vrot.slane %v15, %v94
    %v96 = vmul.f32 %v90, %v95
    %v97 = vadd.f32 %v96, 0.0
    %98 = vset.pattern.permute.xlu0 7
    %99 = vperm.xlu0 %98, %v17
    %v100 = vpop.permute.xlu0 %99
    %v102 = vlaneseq
    %v103 = vshrl.u32 %v102, 7
    %v104 = vsub.s32 5, %v103
    %v105 = vrot.slane %v15, %v104
    %v106 = vmul.f32 %v100, %v105
    %v107 = vadd.f32 %v97, %v106
    %108 = vset.pattern.permute.xlu0 8
    %109 = vperm.xlu0 %108, %v17
    %v110 = vpop.permute.xlu0 %109
    %v112 = vlaneseq
    %v113 = vshrl.u32 %v112, 7
    %v114 = vsub.s32 0, %v113
    %v115 = vrot.slane %v16, %v114
    %v116 = vmul.f32 %v110, %v115
    %v117 = vadd.f32 %v107, %v116
    %v118 = vmul.f32 %v117, %v117
    %v119 = vadd.f32 %v87, %v118
    %v120 = vrsqrt.pop %v119
    %v121 = vmul.f32 %v119, %v120
    %vm122 = vcmp.eq.f32.partialorder %v119, inf
    %v123 = vsel %vm122, %v119, %v121
    %vm124 = vcmp.eq.f32.partialorder %v119, 0.0
    %v125 = vand.u32 %v119, 2147483648
    %v126 = vsel %vm124, %v125, %v123
    %v127 = vsub.f32 0.0, %v126
    %v128 = vmul.f32 %v127, 1.442695
    %v129 = vpow.pop %v128
    %131 = vset.pattern.permute.xlu0 0
    %132 = vperm.xlu0 %131, %v20
    %v133 = vpop.permute.xlu0 %132
    %v135 = vmul.f32 %v133, %v129
    %v136 = vadd.f32 %v135, 0.0
    %138 = vset.pattern.permute.xlu0 0
    %139 = vperm.xlu0 %138, %v18
    %v140 = vpop.permute.xlu0 %139
    %v142 = vmul.f32 %v140, %v31
    %v143 = vadd.f32 %v142, 0.0
    %144 = vset.pattern.permute.xlu0 1
    %145 = vperm.xlu0 %144, %v18
    %v146 = vpop.permute.xlu0 %145
    %v148 = vmul.f32 %v146, %v41
    %v149 = vadd.f32 %v143, %v148
    %150 = vset.pattern.permute.xlu0 2
    %151 = vperm.xlu0 %150, %v18
    %v152 = vpop.permute.xlu0 %151
    %v154 = vmul.f32 %v152, %v51
    %v155 = vadd.f32 %v149, %v154
    %v156 = vmul.f32 %v155, %v155
    %v157 = vadd.f32 %v156, 0.0
    %158 = vset.pattern.permute.xlu0 3
    %159 = vperm.xlu0 %158, %v18
    %v160 = vpop.permute.xlu0 %159
    %v162 = vmul.f32 %v160, %v63
    %v163 = vadd.f32 %v162, 0.0
    %164 = vset.pattern.permute.xlu0 4
    %165 = vperm.xlu0 %164, %v18
    %v166 = vpop.permute.xlu0 %165
    %v168 = vmul.f32 %v166, %v73
    %v169 = vadd.f32 %v163, %v168
    %170 = vset.pattern.permute.xlu0 5
    %171 = vperm.xlu0 %170, %v18
    %v172 = vpop.permute.xlu0 %171
    %v174 = vmul.f32 %v172, %v83
    %v175 = vadd.f32 %v169, %v174
    %v176 = vmul.f32 %v175, %v175
    %v177 = vadd.f32 %v157, %v176
    %178 = vset.pattern.permute.xlu0 6
    %179 = vperm.xlu0 %178, %v18
    %v180 = vpop.permute.xlu0 %179
    %v182 = vmul.f32 %v180, %v95
    %v183 = vadd.f32 %v182, 0.0
    %184 = vset.pattern.permute.xlu0 7
    %185 = vperm.xlu0 %184, %v18
    %v186 = vpop.permute.xlu0 %185
    %v188 = vmul.f32 %v186, %v105
    %v189 = vadd.f32 %v183, %v188
    %190 = vset.pattern.permute.xlu0 8
    %191 = vperm.xlu0 %190, %v18
    %v192 = vpop.permute.xlu0 %191
    %v194 = vmul.f32 %v192, %v115
    %v195 = vadd.f32 %v189, %v194
    %v196 = vmul.f32 %v195, %v195
    %v197 = vadd.f32 %v177, %v196
    %v198 = vrsqrt.pop %v197
    %v199 = vmul.f32 %v197, %v198
    %vm200 = vcmp.eq.f32.partialorder %v197, inf
    %v201 = vsel %vm200, %v197, %v199
    %vm202 = vcmp.eq.f32.partialorder %v197, 0.0
    %v203 = vand.u32 %v197, 2147483648
    %v204 = vsel %vm202, %v203, %v201
    %v205 = vsub.f32 0.0, %v204
    %v206 = vmul.f32 %v205, 1.442695
    %v207 = vpow.pop %v206
    %209 = vset.pattern.permute.xlu0 0
    %210 = vperm.xlu0 %209, %v21
    %v211 = vpop.permute.xlu0 %210
    %v213 = vmul.f32 %v211, %v207
    %v214 = vadd.f32 %v136, %v213
    %216 = vset.pattern.permute.xlu0 0
    %217 = vperm.xlu0 %216, %v19
    %v218 = vpop.permute.xlu0 %217
    %v220 = vmul.f32 %v218, %v31
    %v221 = vadd.f32 %v220, 0.0
    %222 = vset.pattern.permute.xlu0 1
    %223 = vperm.xlu0 %222, %v19
    %v224 = vpop.permute.xlu0 %223
    %v226 = vmul.f32 %v224, %v41
    %v227 = vadd.f32 %v221, %v226
    %228 = vset.pattern.permute.xlu0 2
    %229 = vperm.xlu0 %228, %v19
    %v230 = vpop.permute.xlu0 %229
    %v232 = vmul.f32 %v230, %v51
    %v233 = vadd.f32 %v227, %v232
    %v234 = vmul.f32 %v233, %v233
    %v235 = vadd.f32 %v234, 0.0
    %236 = vset.pattern.permute.xlu0 3
    %237 = vperm.xlu0 %236, %v19
    %v238 = vpop.permute.xlu0 %237
    %v240 = vmul.f32 %v238, %v63
    %v241 = vadd.f32 %v240, 0.0
    %242 = vset.pattern.permute.xlu0 4
    %243 = vperm.xlu0 %242, %v19
    %v244 = vpop.permute.xlu0 %243
    %v246 = vmul.f32 %v244, %v73
    %v247 = vadd.f32 %v241, %v246
    %248 = vset.pattern.permute.xlu0 5
    %249 = vperm.xlu0 %248, %v19
    %v250 = vpop.permute.xlu0 %249
    %v252 = vmul.f32 %v250, %v83
    %v253 = vadd.f32 %v247, %v252
    %v254 = vmul.f32 %v253, %v253
    %v255 = vadd.f32 %v235, %v254
    %256 = vset.pattern.permute.xlu0 6
    %257 = vperm.xlu0 %256, %v19
    %v258 = vpop.permute.xlu0 %257
    %v260 = vmul.f32 %v258, %v95
    %v261 = vadd.f32 %v260, 0.0
    %262 = vset.pattern.permute.xlu0 7
    %263 = vperm.xlu0 %262, %v19
    %v264 = vpop.permute.xlu0 %263
    %v266 = vmul.f32 %v264, %v105
    %v267 = vadd.f32 %v261, %v266
    %268 = vset.pattern.permute.xlu0 8
    %269 = vperm.xlu0 %268, %v19
    %v270 = vpop.permute.xlu0 %269
    %v272 = vmul.f32 %v270, %v115
    %v273 = vadd.f32 %v267, %v272
    %v274 = vmul.f32 %v273, %v273
    %v275 = vadd.f32 %v255, %v274
    %v276 = vrsqrt.pop %v275
    %v277 = vmul.f32 %v275, %v276
    %vm278 = vcmp.eq.f32.partialorder %v275, inf
    %v279 = vsel %vm278, %v275, %v277
    %vm280 = vcmp.eq.f32.partialorder %v275, 0.0
    %v281 = vand.u32 %v275, 2147483648
    %v282 = vsel %vm280, %v281, %v279
    %v283 = vsub.f32 0.0, %v282
    %v284 = vmul.f32 %v283, 1.442695
    %v285 = vpow.pop %v284
    %287 = vset.pattern.permute.xlu0 0
    %288 = vperm.xlu0 %287, %v22
    %v289 = vpop.permute.xlu0 %288
    %v291 = vmul.f32 %v289, %v285
    %v292 = vadd.f32 %v214, %v291
    %293 = vst [vmem:[#allocation2] sm:$0xff] %v292
    // Predicated region
    $region14: #{tpu_custom_call.1} parent=1 // pred_check
      _
    $region15: #{tpu_custom_call.1} parent=1 // pred_check_branch
      %295 = sbr.rel (0) target = $region17
    $region16: #{tpu_custom_call.1} parent=1 // pred_region
      %s297 = ssub.s32 128, 128
      %298 = vsyncadd [#allocation3], %s297
      %s300 = sshll.u32 [#allocation2], 4
      %s301 = int_to_ptr.vmem [resolvable:$true] %s300
      %303 = dma.vmem_to_hbm [thread:$0]  %s301, 128, %s3, [#allocation3]
    $region17: #{tpu_custom_call.1} parent=1 // pred_fallthru
      _
    // Predicated region
    $region18: #{tpu_custom_call.1} parent=1 // pred_check
      _
    $region19: #{tpu_custom_call.1} parent=1 // pred_check_branch
      %305 = sbr.rel (0) target = $region21
    $region20: #{tpu_custom_call.1} parent=1 // pred_region
      %306 = dma.done [#allocation3], 128
    $region21: #{tpu_custom_call.1} parent=1 // pred_fallthru
      _
    %307 = vsyncpa [#allocation3], 1

</llo_original>
